<compile_context>
chip_gen: v7x
topology: tpu7x:2x2x1
jax: 0.10.0
libtpu: 0.0.40
codegen_flags: <defaults>
</compile_context>

<pallas_src>
import functools

import jax
import jax.numpy as jnp
from jax.experimental import pallas as pl
from jax.experimental.pallas import tpu as pltpu

LANE = 128
SUBLANE = 8


def _round_up(n, m):
    return (n + m - 1) // m * m


# ----------------------------------------------------------------------------
# Kernel
# ----------------------------------------------------------------------------
def actor_kernel(x_ref, w1_ref, vec_ref, w2_hbm, w3_hbm, o_ref,
                 w2_vmem, w3_vmem, sem, *, b_real):
    """vec_ref layout (f32, lane-aligned): [gamma(F1P) | beta(F1P) | b2(F2P) | b3(AP)]."""
    F1P = w1_ref.shape[1]
    F2P = w2_vmem.shape[1]
    AP = o_ref.shape[1]

    # Kick off fc2/fc3 weight DMAs immediately; they overlap fc1 + BatchNorm.
    cp2 = pltpu.make_async_copy(w2_hbm, w2_vmem, sem.at[0])
    cp3 = pltpu.make_async_copy(w3_hbm, w3_vmem, sem.at[1])
    cp2.start()
    cp3.start()

    gamma = vec_ref[:, 0:F1P]
    beta = vec_ref[:, F1P:2 * F1P]
    b2 = vec_ref[:, 2 * F1P:2 * F1P + F2P]
    b3 = vec_ref[:, 2 * F1P + F2P:2 * F1P + F2P + AP]

    # fc1 (bias omitted: exactly cancelled by the training-mode BatchNorm below).
    # Padded batch rows are all-zero inputs -> exactly-zero fc1 rows.
    x = x_ref[...].astype(jnp.bfloat16)                       # (BP, S)
    h1 = jnp.dot(x, w1_ref[...],
                 preferred_element_type=jnp.float32)          # (BP, F1P) f32

    # BatchNorm1d, training mode, one-pass stats over the REAL batch rows.
    # Padded rows contribute exactly zero to both sums, so dividing by b_real
    # (static) gives the true batch statistics.
    inv_b = jnp.float32(1.0 / b_real)
    mean = jnp.sum(h1, axis=0, keepdims=True) * inv_b
    mean_sq = jnp.sum(h1 * h1, axis=0, keepdims=True) * inv_b
    var = mean_sq - mean * mean
    scale = gamma * jax.lax.rsqrt(var + 1e-5)                 # gamma folded in
    h1 = (h1 - mean) * scale + beta

    # ReLU
    h1 = jnp.maximum(h1, 0.0)

    # fc2 + ReLU  (wait only for the fc2 weight DMA)
    cp2.wait()
    h2 = jnp.dot(h1.astype(jnp.bfloat16), w2_vmem[...],
                 preferred_element_type=jnp.float32) + b2     # (BP, F2P)
    h2 = jnp.maximum(h2, 0.0)

    # fc3 + tanh  (lane-dense padded output; wrapper slices to action_size)
    cp3.wait()
    h3 = jnp.dot(h2.astype(jnp.bfloat16), w3_vmem[...],
                 preferred_element_type=jnp.float32) + b3     # (BP, AP)
    o_ref[...] = jnp.tanh(h3)


# ----------------------------------------------------------------------------
# Wrapper
# ----------------------------------------------------------------------------
def actor_forward(x, prepared, action_size):
    """x: (B, state_size) or (state_size,) f32. prepared: output of prepare_params."""
    if x.ndim == 1:                       # mirror torch.unsqueeze(x, 0)
        x = x[None, :]
    x = x.astype(jnp.float32)
    B = x.shape[0]
    BP = _round_up(B, SUBLANE)            # sublane-aligned batch (zero-padded rows)
    if BP != B:
        x = jnp.pad(x, ((0, BP - B), (0, 0)))

    w1t, vecs = prepared["w1t"], prepared["vecs"]
    w2t, w3t = prepared["w2t"], prepared["w3t"]
    F1P, F2P, AP = w1t.shape[1], w2t.shape[1], w3t.shape[1]

    def full_spec(shape):
        return pl.BlockSpec(shape, lambda: (0,) * len(shape))

    args = (x, w1t, vecs, w2t, w3t)
    cost = pl.CostEstimate(
        flops=2 * BP * (x.shape[1] * F1P + F1P * F2P + F2P * AP),
        transcendentals=BP * AP + F1P,
        bytes_accessed=sum(int(a.size) * a.dtype.itemsize for a in args)
                       + BP * AP * 4,
    )

    out_padded = pl.pallas_call(
        functools.partial(actor_kernel, b_real=B),
        out_shape=jax.ShapeDtypeStruct((BP, AP), jnp.float32),
        in_specs=[
            full_spec(x.shape),
            full_spec(w1t.shape),
            full_spec(vecs.shape),
            pl.BlockSpec(memory_space=pl.ANY),      # w2t: manual overlapped DMA
            pl.BlockSpec(memory_space=pl.ANY),      # w3t: manual overlapped DMA
        ],
        out_specs=full_spec((BP, AP)),
        scratch_shapes=[
            pltpu.VMEM((F1P, F2P), jnp.bfloat16),
            pltpu.VMEM((F2P, AP), jnp.bfloat16),
            pltpu.SemaphoreType.DMA((2,)),
        ],
        cost_estimate=cost,
    )(*args)

    return out_padded[:B, :action_size]


# ----------------------------------------------------------------------------
# Parameters
# ----------------------------------------------------------------------------
def init_params(key, state_size, action_size, fc1_dim=400, fc2_dim=300):
    """Faithful f32 params mimicking the PyTorch reset_parameters ranges."""
    k1, k2, k3, kb1, kb2, kb3 = jax.random.split(key, 6)
    lim1 = 1.0 / jnp.sqrt(jnp.float32(fc1_dim))   # hidden_init uses weight.size()[0]
    lim2 = 1.0 / jnp.sqrt(jnp.float32(fc2_dim))
    lim3 = 0.003
    # Weights stored pre-transposed: (in_features, out_features)
    w1t = jax.random.uniform(k1, (state_size, fc1_dim), jnp.float32, -lim1, lim1)
    w2t = jax.random.uniform(k2, (fc1_dim, fc2_dim), jnp.float32, -lim2, lim2)
    w3t = jax.random.uniform(k3, (fc2_dim, action_size), jnp.float32, -lim3, lim3)
    # PyTorch Linear bias default init: U(-1/sqrt(fan_in), 1/sqrt(fan_in))
    b1 = jax.random.uniform(kb1, (1, fc1_dim), jnp.float32,
                            -1.0 / jnp.sqrt(jnp.float32(state_size)),
                            1.0 / jnp.sqrt(jnp.float32(state_size)))
    b2 = jax.random.uniform(kb2, (1, fc2_dim), jnp.float32,
                            -1.0 / jnp.sqrt(jnp.float32(fc1_dim)),
                            1.0 / jnp.sqrt(jnp.float32(fc1_dim)))
    b3 = jax.random.uniform(kb3, (1, action_size), jnp.float32,
                            -1.0 / jnp.sqrt(jnp.float32(fc2_dim)),
                            1.0 / jnp.sqrt(jnp.float32(fc2_dim)))
    gamma = jnp.ones((1, fc1_dim), jnp.float32)    # BatchNorm1d affine defaults
    beta = jnp.zeros((1, fc1_dim), jnp.float32)
    return dict(w1t=w1t, b1=b1, gamma=gamma, beta=beta,
                w2t=w2t, b2=b2, w3t=w3t, b3=b3)


def prepare_params(params):
    """One-time kernel prep: zero-pad feature/action dims to multiples of 128,
    cast matmul weights to bf16, drop the fc1 bias (cancelled by training-mode BN),
    and pack the four small per-feature vectors into one lane-aligned array."""
    F1, F2, A = params["w1t"].shape[1], params["w2t"].shape[1], params["w3t"].shape[1]
    F1P, F2P, AP = _round_up(F1, LANE), _round_up(F2, LANE), _round_up(A, LANE)

    def pad2(a, rows, cols):
        return jnp.pad(a, ((0, rows - a.shape[0]), (0, cols - a.shape[1])))

    # Packed small-vector slab: [gamma | beta | b2 | b3], each segment 128-aligned.
    vecs = jnp.concatenate(
        [pad2(params["gamma"], 1, F1P),
         pad2(params["beta"], 1, F1P),
         pad2(params["b2"], 1, F2P),
         pad2(params["b3"], 1, AP)],
        axis=1,
    ).astype(jnp.float32)

    return dict(
        w1t=pad2(params["w1t"], params["w1t"].shape[0], F1P).astype(jnp.bfloat16),
        vecs=vecs,
        w2t=pad2(params["w2t"], F1P, F2P).astype(jnp.bfloat16),
        w3t=pad2(params["w3t"], F2P, AP).astype(jnp.bfloat16),
    )


# ----------------------------------------------------------------------------
# Pure-JAX references
# ----------------------------------------------------------------------------
def actor_reference_f32(x, p):
    """Faithful f32 PyTorch-semantics reference (includes fc1 bias)."""
    if x.ndim == 1:
        x = x[None, :]
    h1 = x @ p["w1t"] + p["b1"]
    mean = jnp.mean(h1, axis=0, keepdims=True)
    var = jnp.mean((h1 - mean) ** 2, axis=0, keepdims=True)
    h1 = (h1 - mean) / jnp.sqrt(var + 1e-5) * p["gamma"] + p["beta"]
    h1 = jnp.maximum(h1, 0.0)
    h2 = jnp.maximum(h1 @ p["w2t"] + p["b2"], 0.0)
    return jnp.tanh(h2 @ p["w3t"] + p["b3"])


def actor_reference_mirrored(x, prepared, action_size):
    """Reference mirroring the kernel's exact numerics (bf16 MXU inputs, f32 acc,
    one-pass BN stats with gamma folded into the rsqrt scale)."""
    if x.ndim == 1:
        x = x[None, :]
    F1P = prepared["w1t"].shape[1]
    F2P = prepared["w2t"].shape[1]
    AP = prepared["w3t"].shape[1]
    vecs = prepared["vecs"]
    gamma = vecs[:, 0:F1P]
    beta = vecs[:, F1P:2 * F1P]
    b2 = vecs[:, 2 * F1P:2 * F1P + F2P]
    b3 = vecs[:, 2 * F1P + F2P:2 * F1P + F2P + AP]

    h1 = jnp.dot(x.astype(jnp.bfloat16), prepared["w1t"],
                 preferred_element_type=jnp.float32)
    inv_b = jnp.float32(1.0 / x.shape[0])
    mean = jnp.sum(h1, axis=0, keepdims=True) * inv_b
    mean_sq = jnp.sum(h1 * h1, axis=0, keepdims=True) * inv_b
    var = mean_sq - mean * mean
    scale = gamma * jax.lax.rsqrt(var + 1e-5)
    h1 = jnp.maximum((h1 - mean) * scale + beta, 0.0)
    h2 = jnp.maximum(jnp.dot(h1.astype(jnp.bfloat16), prepared["w2t"],
                             preferred_element_type=jnp.float32) + b2, 0.0)
    h3 = jnp.dot(h2.astype(jnp.bfloat16), prepared["w3t"],
                 preferred_element_type=jnp.float32) + b3
    return jnp.tanh(h3)[:, :action_size]


# ----------------------------------------------------------------------------
if __name__ == "__main__":
    B, STATE, ACTION = 8, 16, 4            # small shapes consistent with the module
    key = jax.random.PRNGKey(0)
    kx, kp = jax.random.split(key)
    x = jax.random.normal(kx, (B, STATE), jnp.float32)

    params = init_params(kp, STATE, ACTION)          # faithful f32 params
    prepared = prepare_params(params)                # padded / bf16 kernel params

    fwd = jax.jit(functools.partial(actor_forward, action_size=ACTION))
    out = jax.block_until_ready(fwd(x, prepared))
    assert out.shape == (B, ACTION)

    ref_exact = actor_reference_mirrored(x, prepared, ACTION)   # same numerics
    ref_f32 = actor_reference_f32(x, params)                    # PyTorch f32 math
    err_exact = float(jnp.max(jnp.abs(out - ref_exact)))
    err_f32 = float(jnp.max(jnp.abs(out - ref_f32)))
    assert err_exact < 1e-3, f"mismatch vs. bf16-mirrored reference: {err_exact}"
    assert err_f32 < 3e-2, f"mismatch vs. f32 reference: {err_f32}"

    # Non-multiple-of-8 batch exercises the zero-padded-batch path; BN stats
    # must still be computed over the real rows only.
    x5 = jax.random.normal(jax.random.PRNGKey(3), (5, STATE), jnp.float32)
    out5 = jax.block_until_ready(fwd(x5, prepared))
    ref5 = actor_reference_f32(x5, params)
    err5 = float(jnp.max(jnp.abs(out5 - ref5)))
    assert out5.shape == (5, ACTION)
    assert err5 < 3e-2, f"padded-batch mismatch vs. f32 reference: {err5}"

    print("KERNEL_OK")
</pallas_src>

<mosaic_0001>
module attributes {stable_mosaic.version = 11 : i64} {
  func.func @actor_kernel(%arg0: memref<8x16xf32, #tpu.memory_space<vmem>>, %arg1: memref<16x512xbf16, #tpu.memory_space<vmem>>, %arg2: memref<1x1536xf32, #tpu.memory_space<vmem>>, %arg3: memref<512x384xbf16, #tpu.memory_space<any>>, %arg4: memref<384x128xbf16, #tpu.memory_space<any>>, %arg5: memref<8x128xf32, #tpu.memory_space<vmem>>, %arg6: memref<512x384xbf16, #tpu.memory_space<vmem>>, %arg7: memref<384x128xbf16, #tpu.memory_space<vmem>>, %arg8: memref<2x!tpu.dma_semaphore, #tpu.memory_space<semaphore_mem>>) attributes {dimension_semantics = [], scalar_prefetch = 0 : i64, scratch_operands = 3 : i64, tpu.core_type = #tpu.core_type<tc>} {
    %c0_i32 = arith.constant 0 : i32
    %0 = tpu.memref_slice %arg8[%c0_i32] : memref<2x!tpu.dma_semaphore, #tpu.memory_space<semaphore_mem>> -> memref<1x!tpu.dma_semaphore, #tpu.memory_space<semaphore_mem>>
    %1 = tpu.memref_squeeze %0 : memref<1x!tpu.dma_semaphore, #tpu.memory_space<semaphore_mem>> -> memref<!tpu.dma_semaphore, #tpu.memory_space<semaphore_mem>>
    tpu.enqueue_dma source(%arg3 : memref<512x384xbf16, #tpu.memory_space<any>>) target(%arg6 : memref<512x384xbf16, #tpu.memory_space<vmem>>) target_semaphore(%1 : memref<!tpu.dma_semaphore, #tpu.memory_space<semaphore_mem>>)
    %c1_i32 = arith.constant 1 : i32
    %2 = tpu.memref_slice %arg8[%c1_i32] : memref<2x!tpu.dma_semaphore, #tpu.memory_space<semaphore_mem>> -> memref<1x!tpu.dma_semaphore, #tpu.memory_space<semaphore_mem>>
    %3 = tpu.memref_squeeze %2 : memref<1x!tpu.dma_semaphore, #tpu.memory_space<semaphore_mem>> -> memref<!tpu.dma_semaphore, #tpu.memory_space<semaphore_mem>>
    tpu.enqueue_dma source(%arg4 : memref<384x128xbf16, #tpu.memory_space<any>>) target(%arg7 : memref<384x128xbf16, #tpu.memory_space<vmem>>) target_semaphore(%3 : memref<!tpu.dma_semaphore, #tpu.memory_space<semaphore_mem>>)
    %c0 = arith.constant 0 : index
    %c0_0 = arith.constant 0 : index
    %4 = vector.load %arg2[%c0, %c0_0] : memref<1x1536xf32, #tpu.memory_space<vmem>>, vector<1x512xf32>
    %c0_1 = arith.constant 0 : index
    %c512 = arith.constant 512 : index
    %5 = vector.load %arg2[%c0_1, %c512] : memref<1x1536xf32, #tpu.memory_space<vmem>>, vector<1x512xf32>
    %c0_2 = arith.constant 0 : index
    %c1024 = arith.constant 1024 : index
    %6 = vector.load %arg2[%c0_2, %c1024] : memref<1x1536xf32, #tpu.memory_space<vmem>>, vector<1x384xf32>
    %c0_3 = arith.constant 0 : index
    %c1408 = arith.constant 1408 : index
    %7 = vector.load %arg2[%c0_3, %c1408] : memref<1x1536xf32, #tpu.memory_space<vmem>>, vector<1x128xf32>
    %c0_4 = arith.constant 0 : index
    %c0_5 = arith.constant 0 : index
    %8 = vector.load %arg0[%c0_4, %c0_5] : memref<8x16xf32, #tpu.memory_space<vmem>>, vector<8x16xf32>
    %9 = arith.truncf %8 : vector<8x16xf32> to vector<8x16xbf16>
    %c0_6 = arith.constant 0 : index
    %c0_7 = arith.constant 0 : index
    %10 = vector.load %arg1[%c0_6, %c0_7] : memref<16x512xbf16, #tpu.memory_space<vmem>>, vector<16x512xbf16>
    %cst = arith.constant dense<0.000000e+00> : vector<8x512xf32>
    %11 = tpu.matmul %9, %10, %cst {dimension_numbers = #tpu.dot_dimension_numbers<[1], [0], [0], [1], [0, 0, 1, 1], [], []>} : vector<8x16xbf16>, vector<16x512xbf16>, vector<8x512xf32> -> vector<8x512xf32>
    %cst_8 = arith.constant dense<0.000000e+00> : vector<512xf32>
    %12 = vector.multi_reduction <add>, %11, %cst_8 [0] : vector<8x512xf32> to vector<512xf32>
    %13 = vector.shape_cast %12 : vector<512xf32> to vector<1x512xf32>
    %cst_9 = arith.constant 1.250000e-01 : f32
    %14 = vector.broadcast %cst_9 : f32 to vector<1x512xf32>
    %15 = arith.mulf %13, %14 : vector<1x512xf32>
    %16 = arith.mulf %11, %11 : vector<8x512xf32>
    %cst_10 = arith.constant dense<0.000000e+00> : vector<512xf32>
    %17 = vector.multi_reduction <add>, %16, %cst_10 [0] : vector<8x512xf32> to vector<512xf32>
    %18 = vector.shape_cast %17 : vector<512xf32> to vector<1x512xf32>
    %cst_11 = arith.constant 1.250000e-01 : f32
    %19 = vector.broadcast %cst_11 : f32 to vector<1x512xf32>
    %20 = arith.mulf %18, %19 : vector<1x512xf32>
    %21 = arith.mulf %15, %15 : vector<1x512xf32>
    %22 = arith.subf %20, %21 : vector<1x512xf32>
    %cst_12 = arith.constant 9.99999974E-6 : f32
    %23 = vector.broadcast %cst_12 : f32 to vector<1x512xf32>
    %24 = arith.addf %22, %23 : vector<1x512xf32>
    %25 = math.rsqrt %24 : vector<1x512xf32>
    %26 = arith.mulf %4, %25 : vector<1x512xf32>
    %27 = vector.broadcast %15 : vector<1x512xf32> to vector<8x512xf32>
    %28 = arith.subf %11, %27 : vector<8x512xf32>
    %29 = vector.broadcast %26 : vector<1x512xf32> to vector<8x512xf32>
    %30 = arith.mulf %28, %29 : vector<8x512xf32>
    %31 = vector.broadcast %5 : vector<1x512xf32> to vector<8x512xf32>
    %32 = arith.addf %30, %31 : vector<8x512xf32>
    %cst_13 = arith.constant 0.000000e+00 : f32
    %33 = vector.broadcast %cst_13 : f32 to vector<8x512xf32>
    %34 = arith.maximumf %32, %33 : vector<8x512xf32>
    %c0_i32_14 = arith.constant 0 : i32
    %35 = tpu.memref_slice %arg8[%c0_i32_14] : memref<2x!tpu.dma_semaphore, #tpu.memory_space<semaphore_mem>> -> memref<1x!tpu.dma_semaphore, #tpu.memory_space<semaphore_mem>>
    %36 = tpu.memref_squeeze %35 : memref<1x!tpu.dma_semaphore, #tpu.memory_space<semaphore_mem>> -> memref<!tpu.dma_semaphore, #tpu.memory_space<semaphore_mem>>
    tpu.wait_dma2 semaphore(%36 : memref<!tpu.dma_semaphore, #tpu.memory_space<semaphore_mem>>) src(%arg3 : memref<512x384xbf16, #tpu.memory_space<any>>) dst(%arg6 : memref<512x384xbf16, #tpu.memory_space<vmem>>)
    %37 = arith.truncf %34 : vector<8x512xf32> to vector<8x512xbf16>
    %c0_15 = arith.constant 0 : index
    %c0_16 = arith.constant 0 : index
    %38 = vector.load %arg6[%c0_15, %c0_16] : memref<512x384xbf16, #tpu.memory_space<vmem>>, vector<512x384xbf16>
    %cst_17 = arith.constant dense<0.000000e+00> : vector<8x384xf32>
    %39 = tpu.matmul %37, %38, %cst_17 {dimension_numbers = #tpu.dot_dimension_numbers<[1], [0], [0], [1], [0, 0, 1, 1], [], []>} : vector<8x512xbf16>, vector<512x384xbf16>, vector<8x384xf32> -> vector<8x384xf32>
    %40 = vector.broadcast %6 : vector<1x384xf32> to vector<8x384xf32>
    %41 = arith.addf %39, %40 : vector<8x384xf32>
    %cst_18 = arith.constant 0.000000e+00 : f32
    %42 = vector.broadcast %cst_18 : f32 to vector<8x384xf32>
    %43 = arith.maximumf %41, %42 : vector<8x384xf32>
    %c1_i32_19 = arith.constant 1 : i32
    %44 = tpu.memref_slice %arg8[%c1_i32_19] : memref<2x!tpu.dma_semaphore, #tpu.memory_space<semaphore_mem>> -> memref<1x!tpu.dma_semaphore, #tpu.memory_space<semaphore_mem>>
    %45 = tpu.memref_squeeze %44 : memref<1x!tpu.dma_semaphore, #tpu.memory_space<semaphore_mem>> -> memref<!tpu.dma_semaphore, #tpu.memory_space<semaphore_mem>>
    tpu.wait_dma2 semaphore(%45 : memref<!tpu.dma_semaphore, #tpu.memory_space<semaphore_mem>>) src(%arg4 : memref<384x128xbf16, #tpu.memory_space<any>>) dst(%arg7 : memref<384x128xbf16, #tpu.memory_space<vmem>>)
    %46 = arith.truncf %43 : vector<8x384xf32> to vector<8x384xbf16>
    %c0_20 = arith.constant 0 : index
    %c0_21 = arith.constant 0 : index
    %47 = vector.load %arg7[%c0_20, %c0_21] : memref<384x128xbf16, #tpu.memory_space<vmem>>, vector<384x128xbf16>
    %cst_22 = arith.constant dense<0.000000e+00> : vector<8x128xf32>
    %48 = tpu.matmul %46, %47, %cst_22 {dimension_numbers = #tpu.dot_dimension_numbers<[1], [0], [0], [1], [0, 0, 1, 1], [], []>} : vector<8x384xbf16>, vector<384x128xbf16>, vector<8x128xf32> -> vector<8x128xf32>
    %49 = vector.broadcast %7 : vector<1x128xf32> to vector<8x128xf32>
    %50 = arith.addf %48, %49 : vector<8x128xf32>
    %51 = math.tanh %50 : vector<8x128xf32>
    %c0_23 = arith.constant 0 : index
    %c0_24 = arith.constant 0 : index
    %52 = vector.load %arg5[%c0_23, %c0_24] : memref<8x128xf32, #tpu.memory_space<vmem>>, vector<8x128xf32>
    tpu.vector_store %arg5[%c0_23, %c0_24], %51 {strides = array<i32>} : memref<8x128xf32, #tpu.memory_space<vmem>>, vector<8x128xf32>,
    return
  }
}

</mosaic_0001>

<llo_original>
// kernel: actor_forward.1
$region0: #{actor_forward.1}
  #allocation0 [shape = 'u32[]', space=smem, size = 0x4, offset = 0x4, fixed_abs, tag = 'smem constant byte address 0x4 - core index']
  #allocation1 [shape = 'u32[144,128]{1,0:T(1,128)}', space=vmem, size = 0x12000, scoped, tag = 'internal scratch']
  #allocation2 [shape = 'bf16[512,384]{1,0:T(16,128)(2,1)}', space=vmem, size = 0x60000, scoped, tag = 'scratch operand']
  #allocation3 [shape = 'bf16[384,128]{1,0:T(16,128)(2,1)}', space=vmem, size = 0x18000, scoped, tag = 'scratch operand']
  #allocation4 [shape = 's32[2]{0}', space=sflag, size = 0x8, scoped, tag = 'scratch operand']
  #allocation10 [shape = 's32[]', space=sflag, size = 0x4, offset = 0, fixed_abs, tag = 'sflag constant byte address 0x0 - dummy sync flag']
  #allocation12 [shape = 's32[]', space=sflag, size = 0x4, offset = 0, fixed_abs, tag = 'sflag constant byte address 0x0 - dummy sync flag']
  #allocation13 [shape = 's32[]', space=sflag, size = 0x4, offset = 0, fixed_abs, tag = 'sflag constant byte address 0x0 - dummy sync flag']
  #allocation14 [shape = 'u32[]', space=smem, size = 0x4, offset = 0x44, fixed_abs, tag = 'smem constant byte address 0x44 - assertion arg 0']
  #allocation15 [shape = 'u32[]', space=smem, size = 0x4, offset = 0x48, fixed_abs, tag = 'smem constant byte address 0x48 - assertion arg 1']
  %s0 = inlined_call_operand.hbm [shape: f32[8,16], index: 0, kind: input, shape index: {}]
  %s1 = inlined_call_operand.hbm [shape: bf16[16,512], index: 1, kind: input, shape index: {}]
  %s2 = inlined_call_operand.hbm [shape: f32[1,1536], index: 2, kind: input, shape index: {}]
  %s3 = inlined_call_operand.hbm [shape: bf16[512,384], index: 3, kind: input, shape index: {}]
  %s4 = inlined_call_operand.hbm [shape: bf16[384,128], index: 4, kind: input, shape index: {}]
  %s5 = inlined_call_operand.vmem [shape: f32[8,128], index: 5, kind: output, shape index: {}]
  %s6 = sld [smem:[#allocation0]]
  $region38: #{actor_forward.1} parent=0
    _
  %s8 = ssub.s32 1, %s6
  %s9 = scalar_select 0, %s8, %s6
  $region1: #{actor_forward.1} parent=0
    #allocation5 [shape = 'u8[4096]{0}', space=vmem, size = 0x1000, scoped, tag = 'input window, operand 0, single buffered']
    #allocation6 [shape = 's32[1]{0}', space=sflag, size = 0x4, scoped, tag = 'scoped memory for actor_forward.1']
    #allocation7 [shape = 'u8[16384]{0}', space=vmem, size = 0x4000, scoped, tag = 'input window, operand 1, single buffered']
    #allocation8 [shape = 's32[1]{0}', space=sflag, size = 0x4, scoped, tag = 'scoped memory for actor_forward.1']
    #allocation9 [shape = 'u8[6144]{0}', space=vmem, size = 0x1800, scoped, tag = 'input window, operand 2, single buffered']
    #allocation11 [shape = 'u32[9]{0}', space=smem, size = 0x24, scoped, tag = 'DMA stride descriptor']
    %10 = vsyncpa [#allocation6], 0
    %11 = vsyncpa [#allocation8], 0
    // Predicated region
    $region2: #{actor_forward.1} parent=1 // pred_check
      _
    $region3: #{actor_forward.1} parent=1 // pred_check_branch
      %13 = sbr.rel (0) target = $region5
    $region4: #{actor_forward.1} parent=1 // pred_region
      %s15 = ssub.s32 128, 128
      %16 = vsyncadd [#allocation6], %s15
      %s18 = sshll.u32 [#allocation5], 4
      %s19 = int_to_ptr.vmem [resolvable:$true] %s18
      %21 = dma.hbm_to_vmem [thread:$0]  %s0, 128, %s19, [#allocation6]
    $region5: #{actor_forward.1} parent=1 // pred_fallthru
      _
    // Predicated region
    $region6: #{actor_forward.1} parent=1 // pred_check
      _
    $region7: #{actor_forward.1} parent=1 // pred_check_branch
      %23 = sbr.rel (0) target = $region9
    $region8: #{actor_forward.1} parent=1 // pred_region
      %s25 = ssub.s32 512, 512
      %26 = vsyncadd [#allocation8], %s25
      %s27 = sshll.u32 [#allocation7], 4
      %s28 = int_to_ptr.vmem [resolvable:$true] %s27
      %33 = dma.hbm_to_vmem [thread:$0]  %s1, 512, %s28, [#allocation8], 256, 256, 16
    $region9: #{actor_forward.1} parent=1 // pred_fallthru
      _
    // Predicated region
    $region10: #{actor_forward.1} parent=1 // pred_check
      _
    $region11: #{actor_forward.1} parent=1 // pred_check_branch
      %35 = sbr.rel (0) target = $region13
    $region12: #{actor_forward.1} parent=1 // pred_region
      %s37 = ssub.s32 192, 192
      %38 = vsyncadd [#allocation8], %s37
      %s40 = sshll.u32 [#allocation9], 4
      %s41 = int_to_ptr.vmem [resolvable:$true] %s40
      %43 = dma.hbm_to_vmem [thread:$0]  %s2, 192, %s41, [#allocation8]
    $region13: #{actor_forward.1} parent=1 // pred_fallthru
      _
    // Predicated region
    $region14: #{actor_forward.1} parent=1 // pred_check
      _
    $region15: #{actor_forward.1} parent=1 // pred_check_branch
      %45 = sbr.rel (0) target = $region17
    $region16: #{actor_forward.1} parent=1 // pred_region
      %46 = dma.done [#allocation6], 128
    $region17: #{actor_forward.1} parent=1 // pred_fallthru
      _
    // Predicated region
    $region18: #{actor_forward.1} parent=1 // pred_check
      _
    $region19: #{actor_forward.1} parent=1 // pred_check_branch
      %48 = sbr.rel (0) target = $region21
    $region20: #{actor_forward.1} parent=1 // pred_region
      %49 = dma.done [#allocation8], 512
    $region21: #{actor_forward.1} parent=1 // pred_fallthru
      _
    // Predicated region
    $region22: #{actor_forward.1} parent=1 // pred_check
      _
    $region23: #{actor_forward.1} parent=1 // pred_check_branch
      %51 = sbr.rel (0) target = $region25
    $region24: #{actor_forward.1} parent=1 // pred_region
      %52 = dma.done [#allocation8], 192
    $region25: #{actor_forward.1} parent=1 // pred_fallthru
      _
    %s55 = sshll.u32 1, 14
    %s56 = sxor.u32 4294967295, %s55
    %s58 = sld [smem:[#allocation0]]
    %s59 = sadd.s32 2, %s58
    %s61 = sshll.u32 7, 26
    %s62 = sxor.u32 4294967295, %s61
    %s63 = sand.u32 0, %s62
    %s64 = sshll.u32 %s59, 26
    %s65 = sor.u32 %s63, %s64
    %s66 = sshll.u32 [#allocation2], 4
    %s67 = int_to_ptr.vmem [resolvable:$true] %s66
    %70 = sst [smem:[#allocation11]] 384
    %s71 = scalar_lea.smem [#allocation11], 1
    %72 = sst [smem:[%s71]] 384
    %s73 = scalar_lea.smem [#allocation11], 2
    %74 = sst [smem:[%s73]] 3
    %s75 = scalar_lea.smem [#allocation11], 3
    %76 = sst [smem:[%s75]] 64
    %s77 = scalar_lea.smem [#allocation11], 4
    %78 = sst [smem:[%s77]] 128
    %s79 = scalar_lea.smem [#allocation11], 5
    %80 = sst [smem:[%s79]] 2
    %s81 = scalar_lea.smem [#allocation11], 6
    %82 = sst [smem:[%s81]] 192
    %s83 = scalar_lea.smem [#allocation11], 7
    %84 = sst [smem:[%s83]] 64
    %s85 = scalar_lea.smem [#allocation11], 8
    %86 = sst [smem:[%s85]] 4
    %88 = dma.general %s3, 12288, %s67, [#allocation4], [#allocation10], [#allocation11], %s65, 0
    %s89 = scalar_lea.sflag [#allocation4], 1
    // Predicated region
    $region26: #{actor_forward.1} parent=1 // pred_check
      _
    $region27: #{actor_forward.1} parent=1 // pred_check_branch
      %91 = sbr.rel target = $region29
    $region28: #{actor_forward.1} parent=1 // pred_region
      %92 = sst [smem:[#allocation14]] [#allocation13]
      %93 = sst [smem:[#allocation15]] [#allocation12]
    $region29: #{actor_forward.1} parent=1 // pred_fallthru
      _
    %95 = shalt.err (0)
    %s97 = sshll.u32 [#allocation3], 4
    %s98 = int_to_ptr.vmem [resolvable:$true] %s97
    %100 = dma.hbm_to_vmem [thread:$0]  %s4, 3072, %s98, %s89
    %v101 = vld [vmem:[#allocation9] sm:$0xf]
    %v102 = vld [vmem:[#allocation9 + $0x4] sm:$0xf]
    %v103 = vld [vmem:[#allocation9 + $0x8] sm:$0x7]
    %v104 = vld [vmem:[#allocation9 + $0xb] sm:$0x1]
    %v105 = vld [vmem:[#allocation5] sm:$0xff]
    %v106 = vpack.c.bf16 %v105, %v105
    %v107 = vld [vmem:[#allocation7] sm:$0xff]
    %v108 = vld [vmem:[#allocation7 + $0x8] sm:$0xff]
    %v109 = vld [vmem:[#allocation7 + $0x10] sm:$0xff]
    %v110 = vld [vmem:[#allocation7 + $0x18] sm:$0xff]
    %v115 = vunpack.c.l.b16 %v107
    %v116 = vunpack.c.h.b16 %v107
    %v117 = vunpack.c.l.b16 %v108
    %v118 = vunpack.c.h.b16 %v108
    %v119 = vunpack.c.l.b16 %v109
    %v120 = vunpack.c.h.b16 %v109
    %v121 = vunpack.c.l.b16 %v110
    %v122 = vunpack.c.h.b16 %v110
    %v123 = vpack.c.b16 %v119, %v115
    %v124 = vpack.c.b16 %v120, %v116
    %v125 = vpack.c.b16 %v121, %v117
    %v126 = vpack.c.b16 %v122, %v118
    %vm131 = vcmask 130048
    %v133 = vsel %vm131, %v106, 0
    %135 = vmatprep.subr.bf16.mxu0 %v124
    %136 = vmatpush1.bf16.msra.mxu0 %v123
    %137 = vmatprep.subr.bf16.mxu0 0
    %138 = vmatpush1.bf16.msra.mxu0 0
    %139 = vmatprep.subr.bf16.mxu0 0
    %140 = vmatpush1.bf16.msra.mxu0 0
    %141 = vmatprep.subr.bf16.mxu0 0
    %142 = vmatpush1.bf16.msra.mxu0 0
    %143 = vmatprep.subr.bf16.mxu0 0
    %144 = vmatpush1.bf16.msra.mxu0 0
    %145 = vmatprep.subr.bf16.mxu0 0
    %146 = vmatpush1.bf16.msra.mxu0 0
    %147 = vmatprep.subr.bf16.mxu0 0
    %148 = vmatpush1.bf16.msra.mxu0 0
    %149 = vmatprep.subr.bf16.mxu0 0
    %150 = vmatpush1.bf16.msra.mxu0 0
    %151 = vmatprep.subr.bf16.mxu0 0
    %152 = vmatpush1.bf16.msra.mxu0 0
    %153 = vmatprep.subr.bf16.mxu0 0
    %154 = vmatpush1.bf16.msra.mxu0 0
    %155 = vmatprep.subr.bf16.mxu0 0
    %156 = vmatpush1.bf16.msra.mxu0 0
    %157 = vmatprep.subr.bf16.mxu0 0
    %158 = vmatpush1.bf16.msra.mxu0 0
    %159 = vmatprep.subr.bf16.mxu0 0
    %160 = vmatpush1.bf16.msra.mxu0 0
    %161 = vmatprep.subr.bf16.mxu0 0
    %162 = vmatpush1.bf16.msra.mxu0 0
    %163 = vmatprep.subr.bf16.mxu0 0
    %164 = vmatpush1.bf16.msra.mxu0 0
    %165 = vmatprep.subr.bf16.mxu0 0
    %166 = vmatpush1.bf16.msra.mxu0 0
    %167 = vmatprep.mubr.bf16.mxu0 0
    %168 = vmatmul.mubr.bf16.gmra.mrb[0].mxu0 %v133
    %v169 = vpop.f32.mrb[0].mxu0
    %v170 = vadd.f32 0.0, %v169
    %v171 = vpop.f32.mrb[0].mxu0
    %v172 = vadd.f32 0.0, %v171
    %v173 = vpop.f32.mrb[0].mxu0
    %v174 = vpop.f32.mrb[0].mxu0
    %175 = vdwg.mxu0
    %176 = vmatprep.subr.bf16.mxu0 %v126
    %177 = vmatpush1.bf16.msra.mxu0 %v125
    %178 = vmatprep.subr.bf16.mxu0 0
    %179 = vmatpush1.bf16.msra.mxu0 0
    %180 = vmatprep.subr.bf16.mxu0 0
    %181 = vmatpush1.bf16.msra.mxu0 0
    %182 = vmatprep.subr.bf16.mxu0 0
    %183 = vmatpush1.bf16.msra.mxu0 0
    %184 = vmatprep.subr.bf16.mxu0 0
    %185 = vmatpush1.bf16.msra.mxu0 0
    %186 = vmatprep.subr.bf16.mxu0 0
    %187 = vmatpush1.bf16.msra.mxu0 0
    %188 = vmatprep.subr.bf16.mxu0 0
    %189 = vmatpush1.bf16.msra.mxu0 0
    %190 = vmatprep.subr.bf16.mxu0 0
    %191 = vmatpush1.bf16.msra.mxu0 0
    %192 = vmatprep.subr.bf16.mxu0 0
    %193 = vmatpush1.bf16.msra.mxu0 0
    %194 = vmatprep.subr.bf16.mxu0 0
    %195 = vmatpush1.bf16.msra.mxu0 0
    %196 = vmatprep.subr.bf16.mxu0 0
    %197 = vmatpush1.bf16.msra.mxu0 0
    %198 = vmatprep.subr.bf16.mxu0 0
    %199 = vmatpush1.bf16.msra.mxu0 0
    %200 = vmatprep.subr.bf16.mxu0 0
    %201 = vmatpush1.bf16.msra.mxu0 0
    %202 = vmatprep.subr.bf16.mxu0 0
    %203 = vmatpush1.bf16.msra.mxu0 0
    %204 = vmatprep.subr.bf16.mxu0 0
    %205 = vmatpush1.bf16.msra.mxu0 0
    %206 = vmatprep.subr.bf16.mxu0 0
    %207 = vmatpush1.bf16.msra.mxu0 0
    %208 = vmatprep.mubr.bf16.mxu0 0
    %209 = vmatmul.mubr.bf16.gmra.mrb[0].mxu0 %v133
    %v210 = vpop.f32.mrb[0].mxu0
    %v211 = vadd.f32 0.0, %v210
    %v212 = vpop.f32.mrb[0].mxu0
    %v213 = vadd.f32 0.0, %v212
    %v214 = vpop.f32.mrb[0].mxu0
    %v215 = vpop.f32.mrb[0].mxu0
    %216 = vdwg.mxu0
    %v217 = vrot.slane %v170, 4
    %v218 = vadd.f32 %v170, %v217
    %v219 = vrot.slane %v218, 2
    %v220 = vadd.f32 %v218, %v219
    %v221 = vrot.slane %v220, 1
    %v222 = vadd.f32 %v220, %v221
    %v223 = vrot.slane %v172, 4
    %v224 = vadd.f32 %v172, %v223
    %v225 = vrot.slane %v224, 2
    %v226 = vadd.f32 %v224, %v225
    %v227 = vrot.slane %v226, 1
    %v228 = vadd.f32 %v226, %v227
    %v229 = vrot.slane %v211, 4
    %v230 = vadd.f32 %v211, %v229
    %v231 = vrot.slane %v230, 2
    %v232 = vadd.f32 %v230, %v231
    %v233 = vrot.slane %v232, 1
    %v234 = vadd.f32 %v232, %v233
    %v235 = vrot.slane %v213, 4
    %v236 = vadd.f32 %v213, %v235
    %v237 = vrot.slane %v236, 2
    %v238 = vadd.f32 %v236, %v237
    %v239 = vrot.slane %v238, 1
    %v240 = vadd.f32 %v238, %v239
    %v241 = vmul.f32 %v222, 0.125
    %v242 = vmul.f32 %v228, 0.125
    %v243 = vmul.f32 %v234, 0.125
    %v244 = vmul.f32 %v240, 0.125
    %v245 = vmul.f32 %v170, %v170
    %v246 = vmul.f32 %v172, %v172
    %v247 = vmul.f32 %v211, %v211
    %v248 = vmul.f32 %v213, %v213
    %v249 = vrot.slane %v245, 4
    %v250 = vadd.f32 %v245, %v249
    %v251 = vrot.slane %v250, 2
    %v252 = vadd.f32 %v250, %v251
    %v253 = vrot.slane %v252, 1
    %v254 = vadd.f32 %v252, %v253
    %v255 = vrot.slane %v246, 4
    %v256 = vadd.f32 %v246, %v255
    %v257 = vrot.slane %v256, 2
    %v258 = vadd.f32 %v256, %v257
    %v259 = vrot.slane %v258, 1
    %v260 = vadd.f32 %v258, %v259
    %v261 = vrot.slane %v247, 4
    %v262 = vadd.f32 %v247, %v261
    %v263 = vrot.slane %v262, 2
    %v264 = vadd.f32 %v262, %v263
    %v265 = vrot.slane %v264, 1
    %v266 = vadd.f32 %v264, %v265
    %v267 = vrot.slane %v248, 4
    %v268 = vadd.f32 %v248, %v267
    %v269 = vrot.slane %v268, 2
    %v270 = vadd.f32 %v268, %v269
    %v271 = vrot.slane %v270, 1
    %v272 = vadd.f32 %v270, %v271
    %v273 = vmul.f32 %v254, 0.125
    %v274 = vmul.f32 %v260, 0.125
    %v275 = vmul.f32 %v266, 0.125
    %v276 = vmul.f32 %v272, 0.125
    %v277 = vmul.f32 %v241, %v241
    %v278 = vmul.f32 %v242, %v242
    %v279 = vmul.f32 %v243, %v243
    %v280 = vmul.f32 %v244, %v244
    %v281 = vsub.f32 %v273, %v277
    %v282 = vsub.f32 %v274, %v278
    %v283 = vsub.f32 %v275, %v279
    %v284 = vsub.f32 %v276, %v280
    %v285 = vadd.f32 %v281, 1e-05
    %v286 = vadd.f32 %v282, 1e-05
    %v287 = vadd.f32 %v283, 1e-05
    %v288 = vadd.f32 %v284, 1e-05
    %v289 = vrsqrt.pop %v285
    %v290 = vrsqrt.pop %v286
    %v291 = vrsqrt.pop %v287
    %v292 = vrsqrt.pop %v288
    %v297 = vcombine.low %v289, %v290
    %v298 = vcombine.low %v291, %v292
    %v300 = vunpack.c.l.s4 1966171168
    %v301 = vunpack.c.0.s8 %v300
    %v302 = vlaneseq
    %v303 = vshrl.u32 %v302, 7
    %v304 = vsub.s32 %v301, %v303
    %v305 = vrot.slane %v297, %v304
    %v307 = vunpack.c.l.s4 1966171168
    %v308 = vunpack.c.0.s8 %v307
    %v309 = vlaneseq
    %v310 = vshrl.u32 %v309, 7
    %v311 = vsub.s32 %v308, %v310
    %v312 = vrot.slane %v298, %v311
    %v313 = vcombine.low %v305, %v312
    %v315 = vunpack.c.l.s4 1966171168
    %v316 = vunpack.c.0.s8 %v315
    %v317 = vlaneseq
    %v318 = vshrl.u32 %v317, 7
    %v319 = vsub.s32 %v316, %v318
    %v320 = vrot.slane %v313, %v319
    %v322 = vmul.f32 %v101, %v320
    %v323 = vsub.f32 %v170, %v241
    %v324 = vsub.f32 %v172, %v242
    %v325 = vsub.f32 %v211, %v243
    %v326 = vsub.f32 %v213, %v244
    %v328 = vlaneseq
    %v329 = vshrl.u32 %v328, 7
    %v330 = vsub.s32 0, %v329
    %v331 = vrot.slane %v322, %v330
    %v332 = vlaneseq
    %v333 = vshrl.u32 %v332, 7
    %v334 = vsub.s32 1, %v333
    %v335 = vrot.slane %v322, %v334
    %v336 = vlaneseq
    %v337 = vshrl.u32 %v336, 7
    %v338 = vsub.s32 2, %v337
    %v339 = vrot.slane %v322, %v338
    %v340 = vlaneseq
    %v341 = vshrl.u32 %v340, 7
    %v342 = vsub.s32 3, %v341
    %v343 = vrot.slane %v322, %v342
    %v348 = vmul.f32 %v323, %v331
    %v349 = vmul.f32 %v324, %v335
    %v350 = vmul.f32 %v325, %v339
    %v351 = vmul.f32 %v326, %v343
    %v353 = vlaneseq
    %v354 = vshrl.u32 %v353, 7
    %v355 = vsub.s32 0, %v354
    %v356 = vrot.slane %v102, %v355
    %v357 = vlaneseq
    %v358 = vshrl.u32 %v357, 7
    %v359 = vsub.s32 1, %v358
    %v360 = vrot.slane %v102, %v359
    %v361 = vlaneseq
    %v362 = vshrl.u32 %v361, 7
    %v363 = vsub.s32 2, %v362
    %v364 = vrot.slane %v102, %v363
    %v365 = vlaneseq
    %v366 = vshrl.u32 %v365, 7
    %v367 = vsub.s32 3, %v366
    %v368 = vrot.slane %v102, %v367
    %v373 = vadd.f32 %v348, %v356
    %v374 = vadd.f32 %v349, %v360
    %v375 = vadd.f32 %v350, %v364
    %v376 = vadd.f32 %v351, %v368
    %v377 = vmax.f32 %v373, 0.0
    %v378 = vmax.f32 %v374, 0.0
    %v379 = vmax.f32 %v375, 0.0
    %v380 = vmax.f32 %v376, 0.0
    %s381 = smul.u32 4, 64
    %s382 = smul.u32 %s381, 3
    %s383 = sshll.u32 %s382, 4
    %384 = dma.done [#allocation4], %s383
    %v385 = vpack.c.bf16 %v377, %v377
    %v386 = vpack.c.bf16 %v378, %v378
    %v387 = vpack.c.bf16 %v379, %v379
    %v388 = vpack.c.bf16 %v380, %v380
    %v389 = vld [vmem:[#allocation2] sm:$0xff]
    %v390 = vld [vmem:[#allocation2 + $0x8] sm:$0xff]
    %v391 = vld [vmem:[#allocation2 + $0x10] sm:$0xff]
    %v392 = vld [vmem:[#allocation2 + $0x18] sm:$0xff]
    %v393 = vld [vmem:[#allocation2 + $0x20] sm:$0xff]
    %v394 = vld [vmem:[#allocation2 + $0x28] sm:$0xff]
    %v395 = vld [vmem:[#allocation2 + $0x30] sm:$0xff]
    %v396 = vld [vmem:[#allocation2 + $0x38] sm:$0xff]
    %v397 = vld [vmem:[#allocation2 + $0x40] sm:$0xff]
    %v398 = vld [vmem:[#allocation2 + $0x48] sm:$0xff]
    %v399 = vld [vmem:[#allocation2 + $0x50] sm:$0xff]
    %v400 = vld [vmem:[#allocation2 + $0x58] sm:$0xff]
    %v401 = vld [vmem:[#allocation2 + $0x60] sm:$0xff]
    %v402 = vld [vmem:[#allocation2 + $0x68] sm:$0xff]
    %v403 = vld [vmem:[#allocation2 + $0x70] sm:$0xff]
    %v404 = vld [vmem:[#allocation2 + $0x78] sm:$0xff]
    %v405 = vld [vmem:[#allocation2 + $0x80] sm:$0xff]
    %v406 = vld [vmem:[#allocation2 + $0x88] sm:$0xff]
    %v407 = vld [vmem:[#allocation2 + $0x90] sm:$0xff]
    %v408 = vld [vmem:[#allocation2 + $0x98] sm:$0xff]
    %v409 = vld [vmem:[#allocation2 + $0xa0] sm:$0xff]
    %v410 = vld [vmem:[#allocation2 + $0xa8] sm:$0xff]
    %v411 = vld [vmem:[#allocation2 + $0xb0] sm:$0xff]
    %v412 = vld [vmem:[#allocation2 + $0xb8] sm:$0xff]
    %v413 = vld [vmem:[#allocation2 + $0xc0] sm:$0xff]
    %v414 = vld [vmem:[#allocation2 + $0xc8] sm:$0xff]
    %v415 = vld [vmem:[#allocation2 + $0xd0] sm:$0xff]
    %v416 = vld [vmem:[#allocation2 + $0xd8] sm:$0xff]
    %v417 = vld [vmem:[#allocation2 + $0xe0] sm:$0xff]
    %v418 = vld [vmem:[#allocation2 + $0xe8] sm:$0xff]
    %v419 = vld [vmem:[#allocation2 + $0xf0] sm:$0xff]
    %v420 = vld [vmem:[#allocation2 + $0xf8] sm:$0xff]
    %v421 = vld [vmem:[#allocation2 + $0x100] sm:$0xff]
    %v422 = vld [vmem:[#allocation2 + $0x108] sm:$0xff]
    %v423 = vld [vmem:[#allocation2 + $0x110] sm:$0xff]
    %v424 = vld [vmem:[#allocation2 + $0x118] sm:$0xff]
    %v425 = vld [vmem:[#allocation2 + $0x120] sm:$0xff]
    %v426 = vld [vmem:[#allocation2 + $0x128] sm:$0xff]
    %v427 = vld [vmem:[#allocation2 + $0x130] sm:$0xff]
    %v428 = vld [vmem:[#allocation2 + $0x138] sm:$0xff]
    %v429 = vld [vmem:[#allocation2 + $0x140] sm:$0xff]
    %v430 = vld [vmem:[#allocation2 + $0x148] sm:$0xff]
    %v431 = vld [vmem:[#allocation2 + $0x150] sm:$0xff]
    %v432 = vld [vmem:[#allocation2 + $0x158] sm:$0xff]
    %v433 = vld [vmem:[#allocation2 + $0x160] sm:$0xff]
    %v434 = vld [vmem:[#allocation2 + $0x168] sm:$0xff]
    %v435 = vld [vmem:[#allocation2 + $0x170] sm:$0xff]
    %v436 = vld [vmem:[#allocation2 + $0x178] sm:$0xff]
    %v437 = vld [vmem:[#allocation2 + $0x180] sm:$0xff]
    %v438 = vld [vmem:[#allocation2 + $0x188] sm:$0xff]
    %v439 = vld [vmem:[#allocation2 + $0x190] sm:$0xff]
    %v440 = vld [vmem:[#allocation2 + $0x198] sm:$0xff]
    %v441 = vld [vmem:[#allocation2 + $0x1a0] sm:$0xff]
    %v442 = vld [vmem:[#allocation2 + $0x1a8] sm:$0xff]
    %v443 = vld [vmem:[#allocation2 + $0x1b0] sm:$0xff]
    %v444 = vld [vmem:[#allocation2 + $0x1b8] sm:$0xff]
    %v445 = vld [vmem:[#allocation2 + $0x1c0] sm:$0xff]
    %v446 = vld [vmem:[#allocation2 + $0x1c8] sm:$0xff]
    %v447 = vld [vmem:[#allocation2 + $0x1d0] sm:$0xff]
    %v448 = vld [vmem:[#allocation2 + $0x1d8] sm:$0xff]
    %v449 = vld [vmem:[#allocation2 + $0x1e0] sm:$0xff]
    %v450 = vld [vmem:[#allocation2 + $0x1e8] sm:$0xff]
    %v451 = vld [vmem:[#allocation2 + $0x1f0] sm:$0xff]
    %v452 = vld [vmem:[#allocation2 + $0x1f8] sm:$0xff]
    %v453 = vld [vmem:[#allocation2 + $0x200] sm:$0xff]
    %v454 = vld [vmem:[#allocation2 + $0x208] sm:$0xff]
    %v455 = vld [vmem:[#allocation2 + $0x210] sm:$0xff]
    %v456 = vld [vmem:[#allocation2 + $0x218] sm:$0xff]
    %v457 = vld [vmem:[#allocation2 + $0x220] sm:$0xff]
    %v458 = vld [vmem:[#allocation2 + $0x228] sm:$0xff]
    %v459 = vld [vmem:[#allocation2 + $0x230] sm:$0xff]
    %v460 = vld [vmem:[#allocation2 + $0x238] sm:$0xff]
    %v461 = vld [vmem:[#allocation2 + $0x240] sm:$0xff]
    %v462 = vld [vmem:[#allocation2 + $0x248] sm:$0xff]
    %v463 = vld [vmem:[#allocation2 + $0x250] sm:$0xff]
    %v464 = vld [vmem:[#allocation2 + $0x258] sm:$0xff]
    %v465 = vld [vmem:[#allocation2 + $0x260] sm:$0xff]
    %v466 = vld [vmem:[#allocation2 + $0x268] sm:$0xff]
    %v467 = vld [vmem:[#allocation2 + $0x270] sm:$0xff]
    %v468 = vld [vmem:[#allocation2 + $0x278] sm:$0xff]
    %v469 = vld [vmem:[#allocation2 + $0x280] sm:$0xff]
    %v470 = vld [vmem:[#allocation2 + $0x288] sm:$0xff]
    %v471 = vld [vmem:[#allocation2 + $0x290] sm:$0xff]
    %v472 = vld [vmem:[#allocation2 + $0x298] sm:$0xff]
    %v473 = vld [vmem:[#allocation2 + $0x2a0] sm:$0xff]
    %v474 = vld [vmem:[#allocation2 + $0x2a8] sm:$0xff]
    %v475 = vld [vmem:[#allocation2 + $0x2b0] sm:$0xff]
    %v476 = vld [vmem:[#allocation2 + $0x2b8] sm:$0xff]
    %v477 = vld [vmem:[#allocation2 + $0x2c0] sm:$0xff]
    %v478 = vld [vmem:[#allocation2 + $0x2c8] sm:$0xff]
    %v479 = vld [vmem:[#allocation2 + $0x2d0] sm:$0xff]
    %v480 = vld [vmem:[#allocation2 + $0x2d8] sm:$0xff]
    %v481 = vld [vmem:[#allocation2 + $0x2e0] sm:$0xff]
    %v482 = vld [vmem:[#allocation2 + $0x2e8] sm:$0xff]
    %v483 = vld [vmem:[#allocation2 + $0x2f0] sm:$0xff]
    %v484 = vld [vmem:[#allocation2 + $0x2f8] sm:$0xff]
    %v486 = vlaneseq
    %v487 = vshrl.u32 %v486, 7
    %v488 = vsub.s32 0, %v487
    %v489 = vrot.slane %v103, %v488
    %v490 = vlaneseq
    %v491 = vshrl.u32 %v490, 7
    %v492 = vsub.s32 1, %v491
    %v493 = vrot.slane %v103, %v492
    %v494 = vlaneseq
    %v495 = vshrl.u32 %v494, 7
    %v496 = vsub.s32 2, %v495
    %v497 = vrot.slane %v103, %v496
    %501 = vmatprep.subr.bf16.mxu0 %v390
    %502 = vmatpush1.bf16.msra.mxu0 %v389
    %503 = vmatprep.subr.bf16.mxu0 %v393
    %504 = vmatpush1.bf16.msra.mxu0 %v392
    %505 = vmatprep.subr.bf16.mxu0 %v396
    %506 = vmatpush1.bf16.msra.mxu0 %v395
    %507 = vmatprep.subr.bf16.mxu0 %v399
    %508 = vmatpush1.bf16.msra.mxu0 %v398
    %509 = vmatprep.subr.bf16.mxu0 %v402
    %510 = vmatpush1.bf16.msra.mxu0 %v401
    %511 = vmatprep.subr.bf16.mxu0 %v405
    %512 = vmatpush1.bf16.msra.mxu0 %v404
    %513 = vmatprep.subr.bf16.mxu0 %v408
    %514 = vmatpush1.bf16.msra.mxu0 %v407
    %515 = vmatprep.subr.bf16.mxu0 %v411
    %516 = vmatpush1.bf16.msra.mxu0 %v410
    %517 = vmatprep.subr.bf16.mxu0 %v414
    %518 = vmatpush1.bf16.msra.mxu0 %v413
    %519 = vmatprep.subr.bf16.mxu0 %v417
    %520 = vmatpush1.bf16.msra.mxu0 %v416
    %521 = vmatprep.subr.bf16.mxu0 %v420
    %522 = vmatpush1.bf16.msra.mxu0 %v419
    %523 = vmatprep.subr.bf16.mxu0 %v423
    %524 = vmatpush1.bf16.msra.mxu0 %v422
    %525 = vmatprep.subr.bf16.mxu0 %v426
    %526 = vmatpush1.bf16.msra.mxu0 %v425
    %527 = vmatprep.subr.bf16.mxu0 %v429
    %528 = vmatpush1.bf16.msra.mxu0 %v428
    %529 = vmatprep.subr.bf16.mxu0 %v432
    %530 = vmatpush1.bf16.msra.mxu0 %v431
    %531 = vmatprep.subr.bf16.mxu0 %v435
    %532 = vmatpush1.bf16.msra.mxu0 %v434
    %533 = vmatprep.mubr.bf16.mxu0 %v386
    %534 = vmatmul.mubr.bf16.gmra.mrb[0].mxu0 %v385
    %v535 = vpop.f32.mrb[0].mxu0
    %v536 = vadd.f32 %v489, %v535
    %v537 = vpop.f32.mrb[0].mxu0
    %v538 = vadd.f32 %v493, %v537
    %v539 = vpop.f32.mrb[0].mxu0
    %v540 = vpop.f32.mrb[0].mxu0
    %541 = vdwg.mxu0
    %542 = vmatprep.subr.bf16.mxu0 %v438
    %543 = vmatpush1.bf16.msra.mxu0 %v437
    %544 = vmatprep.subr.bf16.mxu0 %v441
    %545 = vmatpush1.bf16.msra.mxu0 %v440
    %546 = vmatprep.subr.bf16.mxu0 %v444
    %547 = vmatpush1.bf16.msra.mxu0 %v443
    %548 = vmatprep.subr.bf16.mxu0 %v447
    %549 = vmatpush1.bf16.msra.mxu0 %v446
    %550 = vmatprep.subr.bf16.mxu0 %v450
    %551 = vmatpush1.bf16.msra.mxu0 %v449
    %552 = vmatprep.subr.bf16.mxu0 %v453
    %553 = vmatpush1.bf16.msra.mxu0 %v452
    %554 = vmatprep.subr.bf16.mxu0 %v456
    %555 = vmatpush1.bf16.msra.mxu0 %v455
    %556 = vmatprep.subr.bf16.mxu0 %v459
    %557 = vmatpush1.bf16.msra.mxu0 %v458
    %558 = vmatprep.subr.bf16.mxu0 %v462
    %559 = vmatpush1.bf16.msra.mxu0 %v461
    %560 = vmatprep.subr.bf16.mxu0 %v465
    %561 = vmatpush1.bf16.msra.mxu0 %v464
    %562 = vmatprep.subr.bf16.mxu0 %v468
    %563 = vmatpush1.bf16.msra.mxu0 %v467
    %564 = vmatprep.subr.bf16.mxu0 %v471
    %565 = vmatpush1.bf16.msra.mxu0 %v470
    %566 = vmatprep.subr.bf16.mxu0 %v474
    %567 = vmatpush1.bf16.msra.mxu0 %v473
    %568 = vmatprep.subr.bf16.mxu0 %v477
    %569 = vmatpush1.bf16.msra.mxu0 %v476
    %570 = vmatprep.subr.bf16.mxu0 %v480
    %571 = vmatpush1.bf16.msra.mxu0 %v479
    %572 = vmatprep.subr.bf16.mxu0 %v483
    %573 = vmatpush1.bf16.msra.mxu0 %v482
    %574 = vmatprep.mubr.bf16.mxu0 %v388
    %575 = vmatmul.mubr.bf16.gmra.mrb[0].mxu0 %v387
    %v576 = vpop.f32.mrb[0].mxu0
    %v577 = vadd.f32 %v536, %v576
    %v578 = vpop.f32.mrb[0].mxu0
    %v579 = vadd.f32 %v538, %v578
    %v580 = vpop.f32.mrb[0].mxu0
    %v581 = vpop.f32.mrb[0].mxu0
    %582 = vdwg.mxu0
    %583 = vmatprep.subr.bf16.mxu0 0
    %584 = vmatpush1.bf16.msra.mxu0 %v391
    %585 = vmatprep.subr.bf16.mxu0 0
    %586 = vmatpush1.bf16.msra.mxu0 %v394
    %587 = vmatprep.subr.bf16.mxu0 0
    %588 = vmatpush1.bf16.msra.mxu0 %v397
    %589 = vmatprep.subr.bf16.mxu0 0
    %590 = vmatpush1.bf16.msra.mxu0 %v400
    %591 = vmatprep.subr.bf16.mxu0 0
    %592 = vmatpush1.bf16.msra.mxu0 %v403
    %593 = vmatprep.subr.bf16.mxu0 0
    %594 = vmatpush1.bf16.msra.mxu0 %v406
    %595 = vmatprep.subr.bf16.mxu0 0
    %596 = vmatpush1.bf16.msra.mxu0 %v409
    %597 = vmatprep.subr.bf16.mxu0 0
    %598 = vmatpush1.bf16.msra.mxu0 %v412
    %599 = vmatprep.subr.bf16.mxu0 0
    %600 = vmatpush1.bf16.msra.mxu0 %v415
    %601 = vmatprep.subr.bf16.mxu0 0
    %602 = vmatpush1.bf16.msra.mxu0 %v418
    %603 = vmatprep.subr.bf16.mxu0 0
    %604 = vmatpush1.bf16.msra.mxu0 %v421
    %605 = vmatprep.subr.bf16.mxu0 0
    %606 = vmatpush1.bf16.msra.mxu0 %v424
    %607 = vmatprep.subr.bf16.mxu0 0
    %608 = vmatpush1.bf16.msra.mxu0 %v427
    %609 = vmatprep.subr.bf16.mxu0 0
    %610 = vmatpush1.bf16.msra.mxu0 %v430
    %611 = vmatprep.subr.bf16.mxu0 0
    %612 = vmatpush1.bf16.msra.mxu0 %v433
    %613 = vmatprep.subr.bf16.mxu0 0
    %614 = vmatpush1.bf16.msra.mxu0 %v436
    %615 = vmatprep.mubr.bf16.mxu0 %v386
    %616 = vmatmul.mubr.bf16.gmra.mrb[0].mxu0 %v385
    %v617 = vpop.f32.mrb[0].mxu0
    %v618 = vadd.f32 %v497, %v617
    %v619 = vpop.f32.mrb[0].mxu0
    %v620 = vpop.f32.mrb[0].mxu0
    %v621 = vpop.f32.mrb[0].mxu0
    %622 = vdwg.mxu0
    %623 = vmatprep.subr.bf16.mxu0 0
    %624 = vmatpush1.bf16.msra.mxu0 %v439
    %625 = vmatprep.subr.bf16.mxu0 0
    %626 = vmatpush1.bf16.msra.mxu0 %v442
    %627 = vmatprep.subr.bf16.mxu0 0
    %628 = vmatpush1.bf16.msra.mxu0 %v445
    %629 = vmatprep.subr.bf16.mxu0 0
    %630 = vmatpush1.bf16.msra.mxu0 %v448
    %631 = vmatprep.subr.bf16.mxu0 0
    %632 = vmatpush1.bf16.msra.mxu0 %v451
    %633 = vmatprep.subr.bf16.mxu0 0
    %634 = vmatpush1.bf16.msra.mxu0 %v454
    %635 = vmatprep.subr.bf16.mxu0 0
    %636 = vmatpush1.bf16.msra.mxu0 %v457
    %637 = vmatprep.subr.bf16.mxu0 0
    %638 = vmatpush1.bf16.msra.mxu0 %v460
    %639 = vmatprep.subr.bf16.mxu0 0
    %640 = vmatpush1.bf16.msra.mxu0 %v463
    %641 = vmatprep.subr.bf16.mxu0 0
    %642 = vmatpush1.bf16.msra.mxu0 %v466
    %643 = vmatprep.subr.bf16.mxu0 0
    %644 = vmatpush1.bf16.msra.mxu0 %v469
    %645 = vmatprep.subr.bf16.mxu0 0
    %646 = vmatpush1.bf16.msra.mxu0 %v472
    %647 = vmatprep.subr.bf16.mxu0 0
    %648 = vmatpush1.bf16.msra.mxu0 %v475
    %649 = vmatprep.subr.bf16.mxu0 0
    %650 = vmatpush1.bf16.msra.mxu0 %v478
    %651 = vmatprep.subr.bf16.mxu0 0
    %652 = vmatpush1.bf16.msra.mxu0 %v481
    %653 = vmatprep.subr.bf16.mxu0 0
    %654 = vmatpush1.bf16.msra.mxu0 %v484
    %655 = vmatprep.mubr.bf16.mxu0 %v388
    %656 = vmatmul.mubr.bf16.gmra.mrb[0].mxu0 %v387
    %v657 = vpop.f32.mrb[0].mxu0
    %v658 = vadd.f32 %v618, %v657
    %v659 = vpop.f32.mrb[0].mxu0
    %v660 = vpop.f32.mrb[0].mxu0
    %v661 = vpop.f32.mrb[0].mxu0
    %662 = vdwg.mxu0
    %v663 = vmax.f32 %v577, 0.0
    %v664 = vmax.f32 %v579, 0.0
    %v665 = vmax.f32 %v658, 0.0
    %s666 = smul.u32 4, 48
    %s667 = smul.u32 %s666, 1
    %s668 = sshll.u32 %s667, 4
    %669 = dma.done %s89, %s668
    %v670 = vpack.c.bf16 %v663, %v663
    %v671 = vpack.c.bf16 %v664, %v664
    %v672 = vpack.c.bf16 %v665, %v665
    %v673 = vld [vmem:[#allocation3] sm:$0xff]
    %v674 = vld [vmem:[#allocation3 + $0x8] sm:$0xff]
    %v675 = vld [vmem:[#allocation3 + $0x10] sm:$0xff]
    %v676 = vld [vmem:[#allocation3 + $0x18] sm:$0xff]
    %v677 = vld [vmem:[#allocation3 + $0x20] sm:$0xff]
    %v678 = vld [vmem:[#allocation3 + $0x28] sm:$0xff]
    %v679 = vld [vmem:[#allocation3 + $0x30] sm:$0xff]
    %v680 = vld [vmem:[#allocation3 + $0x38] sm:$0xff]
    %v681 = vld [vmem:[#allocation3 + $0x40] sm:$0xff]
    %v682 = vld [vmem:[#allocation3 + $0x48] sm:$0xff]
    %v683 = vld [vmem:[#allocation3 + $0x50] sm:$0xff]
    %v684 = vld [vmem:[#allocation3 + $0x58] sm:$0xff]
    %v685 = vld [vmem:[#allocation3 + $0x60] sm:$0xff]
    %v686 = vld [vmem:[#allocation3 + $0x68] sm:$0xff]
    %v687 = vld [vmem:[#allocation3 + $0x70] sm:$0xff]
    %v688 = vld [vmem:[#allocation3 + $0x78] sm:$0xff]
    %v689 = vld [vmem:[#allocation3 + $0x80] sm:$0xff]
    %v690 = vld [vmem:[#allocation3 + $0x88] sm:$0xff]
    %v691 = vld [vmem:[#allocation3 + $0x90] sm:$0xff]
    %v692 = vld [vmem:[#allocation3 + $0x98] sm:$0xff]
    %v693 = vld [vmem:[#allocation3 + $0xa0] sm:$0xff]
    %v694 = vld [vmem:[#allocation3 + $0xa8] sm:$0xff]
    %v695 = vld [vmem:[#allocation3 + $0xb0] sm:$0xff]
    %v696 = vld [vmem:[#allocation3 + $0xb8] sm:$0xff]
    %v698 = vlaneseq
    %v699 = vshrl.u32 %v698, 7
    %v700 = vsub.s32 0, %v699
    %v701 = vrot.slane %v104, %v700
    %703 = vmatprep.subr.bf16.mxu0 0
    %704 = vmatpush1.bf16.msra.mxu0 %v673
    %705 = vmatprep.subr.bf16.mxu0 0
    %706 = vmatpush1.bf16.msra.mxu0 %v674
    %707 = vmatprep.subr.bf16.mxu0 0
    %708 = vmatpush1.bf16.msra.mxu0 %v675
    %709 = vmatprep.subr.bf16.mxu0 0
    %710 = vmatpush1.bf16.msra.mxu0 %v676
    %711 = vmatprep.subr.bf16.mxu0 0
    %712 = vmatpush1.bf16.msra.mxu0 %v677
    %713 = vmatprep.subr.bf16.mxu0 0
    %714 = vmatpush1.bf16.msra.mxu0 %v678
    %715 = vmatprep.subr.bf16.mxu0 0
    %716 = vmatpush1.bf16.msra.mxu0 %v679
    %717 = vmatprep.subr.bf16.mxu0 0
    %718 = vmatpush1.bf16.msra.mxu0 %v680
    %719 = vmatprep.subr.bf16.mxu0 0
    %720 = vmatpush1.bf16.msra.mxu0 %v681
    %721 = vmatprep.subr.bf16.mxu0 0
    %722 = vmatpush1.bf16.msra.mxu0 %v682
    %723 = vmatprep.subr.bf16.mxu0 0
    %724 = vmatpush1.bf16.msra.mxu0 %v683
    %725 = vmatprep.subr.bf16.mxu0 0
    %726 = vmatpush1.bf16.msra.mxu0 %v684
    %727 = vmatprep.subr.bf16.mxu0 0
    %728 = vmatpush1.bf16.msra.mxu0 %v685
    %729 = vmatprep.subr.bf16.mxu0 0
    %730 = vmatpush1.bf16.msra.mxu0 %v686
    %731 = vmatprep.subr.bf16.mxu0 0
    %732 = vmatpush1.bf16.msra.mxu0 %v687
    %733 = vmatprep.subr.bf16.mxu0 0
    %734 = vmatpush1.bf16.msra.mxu0 %v688
    %735 = vmatprep.mubr.bf16.mxu0 %v671
    %736 = vmatmul.mubr.bf16.gmra.mrb[0].mxu0 %v670
    %v737 = vpop.f32.mrb[0].mxu0
    %v738 = vadd.f32 %v701, %v737
    %v739 = vpop.f32.mrb[0].mxu0
    %v740 = vpop.f32.mrb[0].mxu0
    %v741 = vpop.f32.mrb[0].mxu0
    %742 = vdwg.mxu0
    %743 = vmatprep.subr.bf16.mxu0 0
    %744 = vmatpush1.bf16.msra.mxu0 %v689
    %745 = vmatprep.subr.bf16.mxu0 0
    %746 = vmatpush1.bf16.msra.mxu0 %v690
    %747 = vmatprep.subr.bf16.mxu0 0
    %748 = vmatpush1.bf16.msra.mxu0 %v691
    %749 = vmatprep.subr.bf16.mxu0 0
    %750 = vmatpush1.bf16.msra.mxu0 %v692
    %751 = vmatprep.subr.bf16.mxu0 0
    %752 = vmatpush1.bf16.msra.mxu0 %v693
    %753 = vmatprep.subr.bf16.mxu0 0
    %754 = vmatpush1.bf16.msra.mxu0 %v694
    %755 = vmatprep.subr.bf16.mxu0 0
    %756 = vmatpush1.bf16.msra.mxu0 %v695
    %757 = vmatprep.subr.bf16.mxu0 0
    %758 = vmatpush1.bf16.msra.mxu0 %v696
    %759 = vmatprep.subr.bf16.mxu0 0
    %760 = vmatpush1.bf16.msra.mxu0 0
    %761 = vmatprep.subr.bf16.mxu0 0
    %762 = vmatpush1.bf16.msra.mxu0 0
    %763 = vmatprep.subr.bf16.mxu0 0
    %764 = vmatpush1.bf16.msra.mxu0 0
    %765 = vmatprep.subr.bf16.mxu0 0
    %766 = vmatpush1.bf16.msra.mxu0 0
    %767 = vmatprep.subr.bf16.mxu0 0
    %768 = vmatpush1.bf16.msra.mxu0 0
    %769 = vmatprep.subr.bf16.mxu0 0
    %770 = vmatpush1.bf16.msra.mxu0 0
    %771 = vmatprep.subr.bf16.mxu0 0
    %772 = vmatpush1.bf16.msra.mxu0 0
    %773 = vmatprep.subr.bf16.mxu0 0
    %774 = vmatpush1.bf16.msra.mxu0 0
    %775 = vmatprep.mubr.bf16.mxu0 0
    %776 = vmatmul.mubr.bf16.gmra.mrb[0].mxu0 %v672
    %v777 = vpop.f32.mrb[0].mxu0
    %v778 = vadd.f32 %v738, %v777
    %v779 = vpop.f32.mrb[0].mxu0
    %v780 = vpop.f32.mrb[0].mxu0
    %v781 = vpop.f32.mrb[0].mxu0
    %782 = vdwg.mxu0
    %v783 = vtanh.pop %v778
    %784 = vst [vmem:[%s5] sm:$0xff] %v783
    // Predicated region
    $region30: #{actor_forward.1} parent=1 // pred_check
      _
    $region31: #{actor_forward.1} parent=1 // pred_check_branch
      %786 = sbr.rel (0) target = $region33
    $region32: #{actor_forward.1} parent=1 // pred_region
      _
    $region33: #{actor_forward.1} parent=1 // pred_fallthru
      _
    // Predicated region
    $region34: #{actor_forward.1} parent=1 // pred_check
      _
    $region35: #{actor_forward.1} parent=1 // pred_check_branch
      %788 = sbr.rel (0) target = $region37
    $region36: #{actor_forward.1} parent=1 // pred_region
      _
    $region37: #{actor_forward.1} parent=1 // pred_fallthru
      _
    %789 = vsyncpa [#allocation6], 1
    %790 = vsyncpa [#allocation8], 1
  %791 = vsyncmov [#allocation4]
  %s792 = vpop.sfrf %791
  %p793 = scmp.eq.s32.totalorder %s792, 0
  %p794 = pneg %p793
  %796 = shalt.err (%p794)
  %s797 = scalar_lea.sflag [#allocation4], 1
  %798 = vsyncmov %s797
  %s799 = vpop.sfrf %798
  %p800 = scmp.eq.s32.totalorder %s799, 0
  %p801 = pneg %p800
  %803 = shalt.err (%p801)

</llo_original>
